<compile_context>
chip_gen: v5e
topology: v5e:2x2
jax: 0.10.0
libtpu: 0.0.40
codegen_flags: <defaults>
</compile_context>

<pallas_src>
import functools

import jax
import jax.numpy as jnp
import numpy as np
from jax import lax
from jax.experimental import pallas as pl
from jax.experimental.pallas import tpu as pltpu

_MiB = 1024 * 1024


def _round_up(v, m):
    return ((v + m - 1) // m) * m


def _fft_charbonnier_kernel(x_ref, y_ref, basis_hbm, out_r_ref, out_i_ref,
                            basis_vmem, acc_r, acc_i,
                            *, eps, n_rows, kp, n_inner, mxu_dtype):
    """One grid step: rfft(X - Y) for one row tile, complex Charbonnier, accumulate.

    x_ref, y_ref : (TM, W)      tiles of the flattened inputs
    basis_hbm    : (W, 2*Kp)    fused DFT basis [cos | -sin] left in HBM
    out_*_ref    : (1, 1, Kp)   tiny per-core reduced outputs
    basis_vmem   : (W, 2*Kp)    resident VMEM copy of the basis (scratch)
    acc_r, acc_i : (TM, Kp)     per-core f32 accumulators (scratch)
    """
    c = pl.program_id(0)   # core-split index ("parallel")
    j = pl.program_id(1)   # row-tile index within the split ("arbitrary")

    @pl.when(j == 0)
    def _():
        # One-time (per core) resident basis load + accumulator init.
        pltpu.sync_copy(basis_hbm, basis_vmem)
        acc_r[...] = jnp.zeros_like(acc_r)
        acc_i[...] = jnp.zeros_like(acc_i)

    # FFT is linear: rfft(X) - rfft(Y) == rfft(X - Y).  Subtract at streaming
    # precision, then cast to bf16 for a single full-rate MXU pass.
    d = (x_ref[...] - y_ref[...]).astype(mxu_dtype)                  # (TM, W)

    # Fused rFFT: one MXU matmul; real part in lanes [:Kp], imag in [Kp:]
    # (the -sin sign is folded into the basis, so no negate here).
    res = jnp.dot(d, basis_vmem[...], preferred_element_type=jnp.float32)
    dr = res[:, :kp]                                                 # Re rfft
    di = res[:, kp:]                                                 # Im rfft

    # Complex square of diff, plus real eps:  z = diff*diff + eps
    zr = dr * dr - di * di + eps
    zi = 2.0 * dr * di

    # Principal complex sqrt:
    #   sqrt(z) = sqrt((|z|+Re)/2) + i * sign(Im) * sqrt((|z|-Re)/2)
    mag = jnp.sqrt(zr * zr + zi * zi)
    err_r = jnp.sqrt(jnp.maximum((mag + zr) * 0.5, 0.0))
    err_i = jnp.where(zi >= 0.0, 1.0, -1.0) * jnp.sqrt(
        jnp.maximum((mag - zr) * 0.5, 0.0))

    tm = dr.shape[0]
    row0 = (c * n_inner + j) * tm

    # Fast path (interior tiles): pure VPU adds, no masking.
    @pl.when(row0 + tm <= n_rows)
    def _():
        acc_r[...] += err_r
        acc_i[...] += err_i

    # Cold path (ragged / fully-out-of-range tiles): mask padded rows only.
    # The padded frequency lanes are masked once in the wrapper.
    @pl.when(row0 + tm > n_rows)
    def _():
        rows = row0 + lax.broadcasted_iota(jnp.int32, (tm, kp), 0)
        valid = rows < n_rows
        acc_r[...] += jnp.where(valid, err_r, 0.0)
        acc_i[...] += jnp.where(valid, err_i, 0.0)

    # Epilogue: one XLU row-reduce per core; writes back (1, Kp) instead of
    # the whole (TM, Kp) accumulator.
    @pl.when(j == n_inner - 1)
    def _():
        out_r_ref[...] = jnp.sum(acc_r[...], axis=0, keepdims=True)[None]
        out_i_ref[...] = jnp.sum(acc_i[...], axis=0, keepdims=True)[None]


def cl_fft_loss(x, y, *, eps=1e-6, mxu_dtype=jnp.bfloat16):
    """Pallas implementation of CL_FFT_loss.forward. Returns a complex64 scalar."""
    assert x.shape == y.shape
    B, C, H, W = x.shape
    K = W // 2 + 1
    Kp = _round_up(K, 128)
    M = B * C * H

    # Streaming dtype: keep bf16 inputs as bf16 (halves HBM traffic), else f32.
    compute_dtype = jnp.bfloat16 if x.dtype == jnp.bfloat16 else jnp.float32
    itemsize = 2 if compute_dtype == jnp.bfloat16 else 4
    basis_itemsize = jnp.dtype(mxu_dtype).itemsize

    # Generation-aware VMEM budget (v7x: 64 MiB/TC, v5e/v6e: 128 MiB).
    try:
        vmem_cap = int(pltpu.get_tpu_info().vmem_capacity_bytes)
    except Exception:
        vmem_cap = 64 * _MiB                      # conservative fallback
    big_vmem = vmem_cap >= 100 * _MiB
    vmem_limit = min(int(0.75 * vmem_cap), 100 * _MiB)   # ~96 MiB big chips, ~48 MiB v7x
    est_budget = int(0.75 * vmem_limit)

    # Two-way row split only where a second TensorCore exists (v7x heuristic:
    # small VMEM); on single-TC chips it only adds a pipeline flush.
    n_split = 2 if not big_vmem else 1
    # TODO(synk): verify "parallel" shards the leading axis across v7x's two
    # TensorCores; if not, switch that axis to pltpu.CORE_PARALLEL there.

    tm_gran = 16 if compute_dtype == jnp.bfloat16 else 8
    tm_max = 1024 if big_vmem else 256

    def vmem_estimate(t):
        inp = 2 * 2 * t * W * itemsize          # X, Y double-buffered tiles
        bas = W * 2 * Kp * basis_itemsize       # single resident basis copy
        acc = 2 * t * Kp * 4                    # f32 accumulator scratch
        tmp = (2 + 6) * t * Kp * 4              # matmul result + live f32 temps
        return inp + bas + acc + tmp

    rows_per_split = -(-M // n_split)
    tm = max(tm_gran, min(tm_max, _round_up(rows_per_split, tm_gran)))
    while tm > tm_gran and vmem_estimate(tm) > est_budget:
        tm = max(tm_gran, _round_up(tm // 2, tm_gran))
    # TODO(synk): for very large W the resident (W, 2*Kp) basis alone can
    # exceed the VMEM budget; tile the frequency axis with an extra grid dim.

    n_inner = -(-M // (n_split * tm))
    nb_last = max(-(-M // tm) - 1, 0)   # last block index that starts in-bounds

    # No wrapper-side jnp.pad (it would copy both inputs in HBM): ragged and
    # fully-out-of-range tiles are masked in-kernel; fully-OOB block indices
    # are clamped so the pipeline never DMAs past the array.
    xf = x.reshape(M, W).astype(compute_dtype)
    yf = y.reshape(M, W).astype(compute_dtype)

    # DFT basis built in float64 with numpy at trace time, fused & lane-padded:
    # cols [0:K) = cos(2*pi*n*k/W), cols [Kp:Kp+K) = -sin(2*pi*n*k/W).
    n = np.arange(W, dtype=np.float64)[:, None]
    k = np.arange(K, dtype=np.float64)[None, :]
    ang = (2.0 * np.pi / W) * n * k
    basis_np = np.zeros((W, 2 * Kp), dtype=np.float64)
    basis_np[:, :K] = np.cos(ang)
    basis_np[:, Kp:Kp + K] = -np.sin(ang)
    basis = jnp.asarray(basis_np, dtype=mxu_dtype)

    kernel = functools.partial(
        _fft_charbonnier_kernel,
        eps=float(eps), n_rows=M, kp=Kp, n_inner=n_inner, mxu_dtype=mxu_dtype)

    def row_block(ci, ji):
        # Clamp fully-out-of-range tiles back in bounds; their contribution is
        # zeroed by the in-kernel row mask (which uses the *nominal* row0).
        return (jnp.minimum(ci * n_inner + ji, nb_last), 0)

    grid_spec = pltpu.PrefetchScalarGridSpec(
        num_scalar_prefetch=0,
        grid=(n_split, n_inner),
        in_specs=[
            pl.BlockSpec((tm, W), row_block),                      # X rows
            pl.BlockSpec((tm, W), row_block),                      # Y rows
            pl.BlockSpec(memory_space=pl.ANY),                     # basis (HBM)
        ],
        out_specs=[
            pl.BlockSpec((1, 1, Kp), lambda ci, ji: (ci, 0, 0)),   # per-core real
            pl.BlockSpec((1, 1, Kp), lambda ci, ji: (ci, 0, 0)),   # per-core imag
        ],
        scratch_shapes=[
            pltpu.VMEM((W, 2 * Kp), mxu_dtype),    # resident fused basis
            pltpu.VMEM((tm, Kp), jnp.float32),     # real accumulator
            pltpu.VMEM((tm, Kp), jnp.float32),     # imag accumulator
        ],
    )

    out_shape = (
        jax.ShapeDtypeStruct((n_split, 1, Kp), jnp.float32),
        jax.ShapeDtypeStruct((n_split, 1, Kp), jnp.float32),
    )

    vmem_limit_bytes = int(min(max(2 * vmem_estimate(tm), 32 * _MiB), vmem_limit))

    out_r, out_i = pl.pallas_call(
        kernel,
        out_shape=out_shape,
        grid_spec=grid_spec,
        compiler_params=pltpu.CompilerParams(
            dimension_semantics=("parallel", "arbitrary"),
            vmem_limit_bytes=vmem_limit_bytes),
    )(xf, yf, basis)

    # Grid-invariant frequency-lane mask applied once here (hoisted out of the
    # hot loop), then the tiny final reduction + mean.
    col_valid = jnp.arange(Kp, dtype=jnp.int32) < K
    denom = jnp.float32(M * K)
    sr = jnp.sum(jnp.where(col_valid, out_r, 0.0)) / denom
    si = jnp.sum(jnp.where(col_valid, out_i, 0.0)) / denom
    return jax.lax.complex(sr, si)


def _reference(x, y, eps=1e-6):
    """Pure-JAX reference mirroring the PyTorch module."""
    xf = jnp.fft.rfft(x.astype(jnp.float32), axis=-1)
    yf = jnp.fft.rfft(y.astype(jnp.float32), axis=-1)
    diff = xf - yf
    err = jnp.sqrt(diff * diff + eps)
    return jnp.mean(err)


if __name__ == "__main__":
    key = jax.random.PRNGKey(0)
    kx, ky = jax.random.split(key)
    # NCHW, small shapes consistent with an image-style input.
    x = jax.random.normal(kx, (2, 4, 16, 16), dtype=jnp.float32)
    y = jax.random.normal(ky, (2, 4, 16, 16), dtype=jnp.float32)

    loss = jax.block_until_ready(cl_fft_loss(x, y))
    ref = jax.block_until_ready(_reference(x, y))
    # bf16 MXU rFFT carries ~0.2-0.5% per-coefficient error; the mean is far
    # tighter than this tolerance in practice.
    np.testing.assert_allclose(np.asarray(loss), np.asarray(ref),
                               rtol=2e-2, atol=2e-3)

    print("KERNEL_OK")
</pallas_src>

<mosaic_0001>
module attributes {stable_mosaic.version = 11 : i64} {
  func.func @_fft_charbonnier_kernel(%arg0: i32, %arg1: i32, %arg2: memref<64x16xf32, #tpu.memory_space<vmem>>, %arg3: memref<64x16xf32, #tpu.memory_space<vmem>>, %arg4: memref<16x256xbf16, #tpu.memory_space<any>>, %arg5: memref<1x1x128xf32, #tpu.memory_space<vmem>>, %arg6: memref<1x1x128xf32, #tpu.memory_space<vmem>>, %arg7: memref<16x256xbf16, #tpu.memory_space<vmem>>, %arg8: memref<64x128xf32, #tpu.memory_space<vmem>>, %arg9: memref<64x128xf32, #tpu.memory_space<vmem>>) attributes {dimension_semantics = [#tpu.dimension_semantics<parallel>, #tpu.dimension_semantics<arbitrary>], iteration_bounds = array<i64: 2, 1>, scalar_prefetch = 0 : i64, scratch_operands = 3 : i64, tpu.core_type = #tpu.core_type<tc>, window_params = [{transform_indices = @transform_0, window_bounds = array<i64: 64, 16>}, {transform_indices = @transform_1, window_bounds = array<i64: 64, 16>}, {}, {transform_indices = @transform_3, window_bounds = array<i64: 1, 1, 128>}, {transform_indices = @transform_4, window_bounds = array<i64: 1, 1, 128>}]} {
    %c0_i32 = arith.constant 0 : i32
    %0 = arith.cmpi eq, %arg1, %c0_i32 : i32
    %1 = arith.extui %0 : i1 to i32
    %c0_i32_0 = arith.constant 0 : i32
    %2 = arith.cmpi ne, %1, %c0_i32_0 : i32
    scf.if %2 {
      "tpu.region"() ({
        %59 = tpu.sem_alloc : memref<!tpu.dma_semaphore, #tpu.memory_space<semaphore_mem>>
        tpu.enqueue_dma source(%arg4 : memref<16x256xbf16, #tpu.memory_space<any>>) target(%arg7 : memref<16x256xbf16, #tpu.memory_space<vmem>>) target_semaphore(%59 : memref<!tpu.dma_semaphore, #tpu.memory_space<semaphore_mem>>)
        tpu.wait_dma2 semaphore(%59 : memref<!tpu.dma_semaphore, #tpu.memory_space<semaphore_mem>>) src(%arg4 : memref<16x256xbf16, #tpu.memory_space<any>>) dst(%arg7 : memref<16x256xbf16, #tpu.memory_space<vmem>>)
        tpu.yield
      }) : () -> ()
      %cst_22 = arith.constant 0.000000e+00 : f32
      %55 = vector.broadcast %cst_22 : f32 to vector<64x128xf32>
      %c0_23 = arith.constant 0 : index
      %c0_24 = arith.constant 0 : index
      %56 = vector.load %arg8[%c0_23, %c0_24] : memref<64x128xf32, #tpu.memory_space<vmem>>, vector<64x128xf32>
      tpu.vector_store %arg8[%c0_23, %c0_24], %55 {strides = array<i32>} : memref<64x128xf32, #tpu.memory_space<vmem>>, vector<64x128xf32>,
      %cst_25 = arith.constant 0.000000e+00 : f32
      %57 = vector.broadcast %cst_25 : f32 to vector<64x128xf32>
      %c0_26 = arith.constant 0 : index
      %c0_27 = arith.constant 0 : index
      %58 = vector.load %arg9[%c0_26, %c0_27] : memref<64x128xf32, #tpu.memory_space<vmem>>, vector<64x128xf32>
      tpu.vector_store %arg9[%c0_26, %c0_27], %57 {strides = array<i32>} : memref<64x128xf32, #tpu.memory_space<vmem>>, vector<64x128xf32>,
    } else {
    }
    %c0 = arith.constant 0 : index
    %c0_1 = arith.constant 0 : index
    %3 = vector.load %arg2[%c0, %c0_1] : memref<64x16xf32, #tpu.memory_space<vmem>>, vector<64x16xf32>
    %c0_2 = arith.constant 0 : index
    %c0_3 = arith.constant 0 : index
    %4 = vector.load %arg3[%c0_2, %c0_3] : memref<64x16xf32, #tpu.memory_space<vmem>>, vector<64x16xf32>
    %5 = arith.subf %3, %4 : vector<64x16xf32>
    %6 = arith.truncf %5 : vector<64x16xf32> to vector<64x16xbf16>
    %c0_4 = arith.constant 0 : index
    %c0_5 = arith.constant 0 : index
    %7 = vector.load %arg7[%c0_4, %c0_5] : memref<16x256xbf16, #tpu.memory_space<vmem>>, vector<16x256xbf16>
    %cst = arith.constant dense<0.000000e+00> : vector<64x256xf32>
    %8 = tpu.matmul %6, %7, %cst {dimension_numbers = #tpu.dot_dimension_numbers<[1], [0], [0], [1], [0, 0, 1, 1], [], []>} : vector<64x16xbf16>, vector<16x256xbf16>, vector<64x256xf32> -> vector<64x256xf32>
    %9 = vector.extract_strided_slice %8 {offsets = [0, 0], sizes = [64, 128], strides = [1, 1]} : vector<64x256xf32> to vector<64x128xf32>
    %10 = vector.extract_strided_slice %8 {offsets = [0, 128], sizes = [64, 128], strides = [1, 1]} : vector<64x256xf32> to vector<64x128xf32>
    %11 = arith.mulf %9, %9 : vector<64x128xf32>
    %12 = arith.mulf %10, %10 : vector<64x128xf32>
    %13 = arith.subf %11, %12 : vector<64x128xf32>
    %cst_6 = arith.constant 9.99999997E-7 : f32
    %14 = vector.broadcast %cst_6 : f32 to vector<64x128xf32>
    %15 = arith.addf %13, %14 : vector<64x128xf32>
    %cst_7 = arith.constant 2.000000e+00 : f32
    %16 = vector.broadcast %cst_7 : f32 to vector<64x128xf32>
    %17 = arith.mulf %16, %9 : vector<64x128xf32>
    %18 = arith.mulf %17, %10 : vector<64x128xf32>
    %19 = arith.mulf %15, %15 : vector<64x128xf32>
    %20 = arith.mulf %18, %18 : vector<64x128xf32>
    %21 = arith.addf %19, %20 : vector<64x128xf32>
    %22 = math.sqrt %21 : vector<64x128xf32>
    %23 = arith.addf %22, %15 : vector<64x128xf32>
    %cst_8 = arith.constant 5.000000e-01 : f32
    %24 = vector.broadcast %cst_8 : f32 to vector<64x128xf32>
    %25 = arith.mulf %23, %24 : vector<64x128xf32>
    %cst_9 = arith.constant 0.000000e+00 : f32
    %26 = vector.broadcast %cst_9 : f32 to vector<64x128xf32>
    %27 = arith.maximumf %25, %26 : vector<64x128xf32>
    %28 = math.sqrt %27 : vector<64x128xf32>
    %cst_10 = arith.constant 0.000000e+00 : f32
    %29 = vector.broadcast %cst_10 : f32 to vector<64x128xf32>
    %30 = arith.cmpf oge, %18, %29 : vector<64x128xf32>
    %cst_11 = arith.constant 1.000000e+00 : f32
    %cst_12 = arith.constant -1.000000e+00 : f32
    %31 = vector.broadcast %cst_11 : f32 to vector<64x128xf32>
    %32 = vector.broadcast %cst_12 : f32 to vector<64x128xf32>
    %33 = arith.select %30, %31, %32 : vector<64x128xi1>, vector<64x128xf32>
    %34 = arith.subf %22, %15 : vector<64x128xf32>
    %cst_13 = arith.constant 5.000000e-01 : f32
    %35 = vector.broadcast %cst_13 : f32 to vector<64x128xf32>
    %36 = arith.mulf %34, %35 : vector<64x128xf32>
    %cst_14 = arith.constant 0.000000e+00 : f32
    %37 = vector.broadcast %cst_14 : f32 to vector<64x128xf32>
    %38 = arith.maximumf %36, %37 : vector<64x128xf32>
    %39 = math.sqrt %38 : vector<64x128xf32>
    %40 = arith.mulf %33, %39 : vector<64x128xf32>
    %c1_i32 = arith.constant 1 : i32
    %41 = arith.muli %arg0, %c1_i32 : i32
    %42 = arith.addi %41, %arg1 : i32
    %c64_i32 = arith.constant 64 : i32
    %43 = arith.muli %42, %c64_i32 : i32
    %c64_i32_15 = arith.constant 64 : i32
    %44 = arith.addi %43, %c64_i32_15 : i32
    %c128_i32 = arith.constant 128 : i32
    %45 = arith.cmpi sle, %44, %c128_i32 : i32
    %46 = arith.extui %45 : i1 to i32
    %c0_i32_16 = arith.constant 0 : i32
    %47 = arith.cmpi ne, %46, %c0_i32_16 : i32
    scf.if %47 {
      %c0_22 = arith.constant 0 : index
      %c0_23 = arith.constant 0 : index
      %55 = vector.load %arg8[%c0_22, %c0_23] : memref<64x128xf32, #tpu.memory_space<vmem>>, vector<64x128xf32>
      %56 = arith.addf %55, %28 : vector<64x128xf32>
      %c0_24 = arith.constant 0 : index
      %c0_25 = arith.constant 0 : index
      %57 = vector.load %arg8[%c0_24, %c0_25] : memref<64x128xf32, #tpu.memory_space<vmem>>, vector<64x128xf32>
      tpu.vector_store %arg8[%c0_24, %c0_25], %56 {strides = array<i32>} : memref<64x128xf32, #tpu.memory_space<vmem>>, vector<64x128xf32>,
      %c0_26 = arith.constant 0 : index
      %c0_27 = arith.constant 0 : index
      %58 = vector.load %arg9[%c0_26, %c0_27] : memref<64x128xf32, #tpu.memory_space<vmem>>, vector<64x128xf32>
      %59 = arith.addf %58, %40 : vector<64x128xf32>
      %c0_28 = arith.constant 0 : index
      %c0_29 = arith.constant 0 : index
      %60 = vector.load %arg9[%c0_28, %c0_29] : memref<64x128xf32, #tpu.memory_space<vmem>>, vector<64x128xf32>
      tpu.vector_store %arg9[%c0_28, %c0_29], %59 {strides = array<i32>} : memref<64x128xf32, #tpu.memory_space<vmem>>, vector<64x128xf32>,
    } else {
    }
    %c64_i32_17 = arith.constant 64 : i32
    %48 = arith.addi %43, %c64_i32_17 : i32
    %c128_i32_18 = arith.constant 128 : i32
    %49 = arith.cmpi sgt, %48, %c128_i32_18 : i32
    %50 = arith.extui %49 : i1 to i32
    %c0_i32_19 = arith.constant 0 : i32
    %51 = arith.cmpi ne, %50, %c0_i32_19 : i32
    scf.if %51 {
      %55 = tpu.iota {dimensions = array<i32: 0>} : vector<64x128xi32>
      %56 = vector.broadcast %43 : i32 to vector<64x128xi32>
      %57 = arith.addi %56, %55 : vector<64x128xi32>
      %c128_i32_22 = arith.constant 128 : i32
      %58 = vector.broadcast %c128_i32_22 : i32 to vector<64x128xi32>
      %59 = arith.cmpi slt, %57, %58 : vector<64x128xi32>
      %c0_23 = arith.constant 0 : index
      %c0_24 = arith.constant 0 : index
      %60 = vector.load %arg8[%c0_23, %c0_24] : memref<64x128xf32, #tpu.memory_space<vmem>>, vector<64x128xf32>
      %cst_25 = arith.constant 0.000000e+00 : f32
      %61 = vector.broadcast %cst_25 : f32 to vector<64x128xf32>
      %62 = arith.select %59, %28, %61 : vector<64x128xi1>, vector<64x128xf32>
      %63 = arith.addf %60, %62 : vector<64x128xf32>
      %c0_26 = arith.constant 0 : index
      %c0_27 = arith.constant 0 : index
      %64 = vector.load %arg8[%c0_26, %c0_27] : memref<64x128xf32, #tpu.memory_space<vmem>>, vector<64x128xf32>
      tpu.vector_store %arg8[%c0_26, %c0_27], %63 {strides = array<i32>} : memref<64x128xf32, #tpu.memory_space<vmem>>, vector<64x128xf32>,
      %c0_28 = arith.constant 0 : index
      %c0_29 = arith.constant 0 : index
      %65 = vector.load %arg9[%c0_28, %c0_29] : memref<64x128xf32, #tpu.memory_space<vmem>>, vector<64x128xf32>
      %cst_30 = arith.constant 0.000000e+00 : f32
      %66 = vector.broadcast %cst_30 : f32 to vector<64x128xf32>
      %67 = arith.select %59, %40, %66 : vector<64x128xi1>, vector<64x128xf32>
      %68 = arith.addf %65, %67 : vector<64x128xf32>
      %c0_31 = arith.constant 0 : index
      %c0_32 = arith.constant 0 : index
      %69 = vector.load %arg9[%c0_31, %c0_32] : memref<64x128xf32, #tpu.memory_space<vmem>>, vector<64x128xf32>
      tpu.vector_store %arg9[%c0_31, %c0_32], %68 {strides = array<i32>} : memref<64x128xf32, #tpu.memory_space<vmem>>, vector<64x128xf32>,
    } else {
    }
    %c0_i32_20 = arith.constant 0 : i32
    %52 = arith.cmpi eq, %arg1, %c0_i32_20 : i32
    %53 = arith.extui %52 : i1 to i32
    %c0_i32_21 = arith.constant 0 : i32
    %54 = arith.cmpi ne, %53, %c0_i32_21 : i32
    scf.if %54 {
      %c0_22 = arith.constant 0 : index
      %c0_23 = arith.constant 0 : index
      %55 = vector.load %arg8[%c0_22, %c0_23] : memref<64x128xf32, #tpu.memory_space<vmem>>, vector<64x128xf32>
      %cst_24 = arith.constant dense<0.000000e+00> : vector<128xf32>
      %56 = vector.multi_reduction <add>, %55, %cst_24 [0] : vector<64x128xf32> to vector<128xf32>
      %57 = vector.shape_cast %56 : vector<128xf32> to vector<1x128xf32>
      %58 = vector.shape_cast %57 : vector<1x128xf32> to vector<1x1x128xf32>
      %c0_25 = arith.constant 0 : index
      %c0_26 = arith.constant 0 : index
      %c0_27 = arith.constant 0 : index
      %59 = vector.load %arg5[%c0_25, %c0_26, %c0_27] : memref<1x1x128xf32, #tpu.memory_space<vmem>>, vector<1x1x128xf32>
      tpu.vector_store %arg5[%c0_25, %c0_26, %c0_27], %58 {strides = array<i32>} : memref<1x1x128xf32, #tpu.memory_space<vmem>>, vector<1x1x128xf32>,
      %c0_28 = arith.constant 0 : index
      %c0_29 = arith.constant 0 : index
      %60 = vector.load %arg9[%c0_28, %c0_29] : memref<64x128xf32, #tpu.memory_space<vmem>>, vector<64x128xf32>
      %cst_30 = arith.constant dense<0.000000e+00> : vector<128xf32>
      %61 = vector.multi_reduction <add>, %60, %cst_30 [0] : vector<64x128xf32> to vector<128xf32>
      %62 = vector.shape_cast %61 : vector<128xf32> to vector<1x128xf32>
      %63 = vector.shape_cast %62 : vector<1x128xf32> to vector<1x1x128xf32>
      %c0_31 = arith.constant 0 : index
      %c0_32 = arith.constant 0 : index
      %c0_33 = arith.constant 0 : index
      %64 = vector.load %arg6[%c0_31, %c0_32, %c0_33] : memref<1x1x128xf32, #tpu.memory_space<vmem>>, vector<1x1x128xf32>
      tpu.vector_store %arg6[%c0_31, %c0_32, %c0_33], %63 {strides = array<i32>} : memref<1x1x128xf32, #tpu.memory_space<vmem>>, vector<1x1x128xf32>,
    } else {
    }
    return
  }
  func.func @transform_0(%arg0: i32, %arg1: i32) -> (i32, i32) {
    %c1_i32 = arith.constant 1 : i32
    %0 = arith.muli %arg0, %c1_i32 : i32
    %1 = arith.addi %0, %arg1 : i32
    %c1_i32_0 = arith.constant 1 : i32
    %2 = arith.minsi %1, %c1_i32_0 : i32
    %c0_i32 = arith.constant 0 : i32
    %c0_i32_1 = arith.constant 0 : i32
    return %2, %c0_i32 : i32, i32
  }
  func.func @transform_1(%arg0: i32, %arg1: i32) -> (i32, i32) {
    %c1_i32 = arith.constant 1 : i32
    %0 = arith.muli %arg0, %c1_i32 : i32
    %1 = arith.addi %0, %arg1 : i32
    %c1_i32_0 = arith.constant 1 : i32
    %2 = arith.minsi %1, %c1_i32_0 : i32
    %c0_i32 = arith.constant 0 : i32
    %c0_i32_1 = arith.constant 0 : i32
    return %2, %c0_i32 : i32, i32
  }
  func.func @transform_3(%arg0: i32, %arg1: i32) -> (i32, i32, i32) {
    %c0_i32 = arith.constant 0 : i32
    %c0_i32_0 = arith.constant 0 : i32
    %c0_i32_1 = arith.constant 0 : i32
    return %arg0, %c0_i32, %c0_i32_0 : i32, i32, i32
  }
  func.func @transform_4(%arg0: i32, %arg1: i32) -> (i32, i32, i32) {
    %c0_i32 = arith.constant 0 : i32
    %c0_i32_0 = arith.constant 0 : i32
    %c0_i32_1 = arith.constant 0 : i32
    return %arg0, %c0_i32, %c0_i32_0 : i32, i32, i32
  }
}

</mosaic_0001>

<llo_original>
// kernel: tpu_custom_call.1
$region0: #{tpu_custom_call.1}
  #allocation0 [shape = 'u32[]', space=smem, size = 0x4, offset = 0x4, fixed_abs, tag = 'smem constant byte address 0x4 - core index']
  #allocation1 [shape = 'u32[72,128]{1,0:T(1,128)}', space=vmem, size = 0x9000, scoped, tag = 'internal scratch']
  #allocation2 [shape = 'bf16[16,256]{1,0:T(8,128)(2,1)}', space=vmem, size = 0x2000, scoped, tag = 'scratch operand']
  #allocation3 [shape = 'f32[64,128]{1,0:T(8,128)}', space=vmem, size = 0x8000, scoped, tag = 'scratch operand']
  #allocation4 [shape = 'f32[64,128]{1,0:T(8,128)}', space=vmem, size = 0x8000, scoped, tag = 'scratch operand']
  #allocation10 [shape = 's32[]', space=sflag, size = 0x4, offset = 0, fixed_abs, tag = 'sflag constant byte address 0x0 - dummy sync flag']
  %s0 = inlined_call_operand.vmem [shape: f32[128,16], index: 0, kind: input, shape index: {}]
  %s1 = inlined_call_operand.vmem [shape: f32[128,16], index: 1, kind: input, shape index: {}]
  %s2 = inlined_call_operand.vmem [shape: bf16[16,256], index: 2, kind: input, shape index: {}]
  %s3 = inlined_call_operand.hbm [shape: f32[2,1,128], index: 3, kind: output, shape index: {0}]
  %s4 = inlined_call_operand.hbm [shape: f32[2,1,128], index: 4, kind: output, shape index: {1}]
  %5 = xla_tuple %s3, %s4
  %s6 = sld [smem:[#allocation0]]
  $region85: #{tpu_custom_call.1} parent=0
    _
  %s8 = ssub.s32 1, %s6
  %s9 = scalar_select 0, %s8, %s6
  $region1: #{tpu_custom_call.1} parent=0
    #allocation5 [shape = 'u8[1024]{0}', space=vmem, size = 0x400, scoped, tag = 'output window, operand 0']
    #allocation6 [shape = 's32[2]{0}', space=sflag, size = 0x8, scoped, tag = 'scoped memory for tpu_custom_call.1']
    #allocation7 [shape = 'u8[1024]{0}', space=vmem, size = 0x400, scoped, tag = 'output window, operand 1']
    #allocation8 [shape = 's32[2]{0}', space=sflag, size = 0x8, scoped, tag = 'scoped memory for tpu_custom_call.1']
    %10 = vsyncpa [#allocation6], 0
    %s11 = scalar_lea.sflag [#allocation6], 1
    %12 = vsyncpa %s11, 0
    %13 = vsyncpa [#allocation8], 0
    %s14 = scalar_lea.sflag [#allocation8], 1
    %15 = vsyncpa %s14, 0
    loop: start=0, step=1, limit=4
    $region2: #{tpu_custom_call.1} parent=1 // loop_pre_header
      _
    $region3: #{tpu_custom_call.1} parent=1 // loop_header
      %s17 = sphi 0, %s21
      %p18 = scmp.ge.s32.totalorder %s17, 4
      %s24 = sphi 0, %s36
      %s25 = sphi 0, %s32
      %s26 = sphi 0, %s24
      %s27 = sphi 0, %s25
      %s28 = sphi 0, %s26
      %s29 = sphi 0, %s27
      %s45 = sphi 0, %s47
      %s48 = sphi 0, %s45
      %s49 = sphi 0, %s48
      %s65 = sphi 0, %s49
      %s77 = sphi 0, %s79
      %s80 = sphi 0, %s77
      %s81 = sphi 0, %s80
      %s97 = sphi 0, %s81
      %s103 = sphi 0, %s105
      %s106 = sphi 0, %s103
      %s107 = sphi 0, %s106
      %s123 = sphi 0, %s107
      %s129 = sphi 0, %s131
      %s132 = sphi 0, %s129
      %s133 = sphi 0, %s132
      %s149 = sphi 0, %s133
    $region4: #{tpu_custom_call.1} parent=1 // loop_header_branch
      %20 = sbr.rel (%p18) target = $region8
    $region5: #{tpu_custom_call.1} parent=1 // loop_body
      %s22 = ssub.s32 %s17, 1
      %s23 = ssub.s32 %s17, 2
      %s30 = sadd.s32 1, %s25
      %p31 = scmp.ge.s32.totalorder %s30, 1
      %s32 = scalar_select %p31, 0, %s30
      %s33 = sadd.s32 1, %s24
      %s34 = scalar_select %p31, %s33, %s24
      %p35 = scmp.ge.s32.totalorder %s34, 2
      %s36 = scalar_select %p35, 0, %s34
      %s37 = sadd.s32 %s24, %s25
      %p38 = scmp.lt.s32.totalorder %s37, 1
      %s39 = scalar_select %p38, %s37, 1
      %s40 = sadd.s32 %s36, %s32
      %p41 = scmp.lt.s32.totalorder %s40, 1
      %s42 = scalar_select %p41, %s40, 1
      %s43 = ssub.s32 %s39, %s42
      %p44 = scmp.eq.s32.totalorder %s43, 0
      %s46 = sadd.s32 %s45, 1
      %s47 = scalar_select %p44, %s45, %s46
      %p50 = pneg %p44
      %p51 = scmp.eq.s32.totalorder %s17, 1
      %p52 = por %p50, %p51
      %p53 = scmp.ne.s32.totalorder %s45, %s48
      %p54 = scmp.eq.s32.totalorder %s17, 0
      %p55 = por %p53, %p54
      %p56 = scmp.ne.s32.totalorder %s45, %s48
      %p57 = scmp.eq.s32.totalorder %s22, 1
      %p58 = por %p56, %p57
      %p59 = scmp.ne.s32.totalorder %s48, %s49
      %p60 = scmp.eq.s32.totalorder %s22, 0
      %p61 = por %p59, %p60
      %p62 = scmp.ne.s32.totalorder %s48, %s49
      %p63 = scmp.eq.s32.totalorder %s23, 1
      %p64 = por %p62, %p63
      %p66 = scmp.ne.s32.totalorder %s49, %s65
      %p67 = scmp.eq.s32.totalorder %s23, 0
      %p68 = por %p66, %p67
      %s69 = sadd.s32 %s24, %s25
      %p70 = scmp.lt.s32.totalorder %s69, 1
      %s71 = scalar_select %p70, %s69, 1
      %s72 = sadd.s32 %s36, %s32
      %p73 = scmp.lt.s32.totalorder %s72, 1
      %s74 = scalar_select %p73, %s72, 1
      %s75 = ssub.s32 %s71, %s74
      %p76 = scmp.eq.s32.totalorder %s75, 0
      %s78 = sadd.s32 %s77, 1
      %s79 = scalar_select %p76, %s77, %s78
      %p82 = pneg %p76
      %p83 = scmp.eq.s32.totalorder %s17, 1
      %p84 = por %p82, %p83
      %p85 = scmp.ne.s32.totalorder %s77, %s80
      %p86 = scmp.eq.s32.totalorder %s17, 0
      %p87 = por %p85, %p86
      %p88 = scmp.ne.s32.totalorder %s77, %s80
      %p89 = scmp.eq.s32.totalorder %s22, 1
      %p90 = por %p88, %p89
      %p91 = scmp.ne.s32.totalorder %s80, %s81
      %p92 = scmp.eq.s32.totalorder %s22, 0
      %p93 = por %p91, %p92
      %p94 = scmp.ne.s32.totalorder %s80, %s81
      %p95 = scmp.eq.s32.totalorder %s23, 1
      %p96 = por %p94, %p95
      %p98 = scmp.ne.s32.totalorder %s81, %s97
      %p99 = scmp.eq.s32.totalorder %s23, 0
      %p100 = por %p98, %p99
      %s101 = ssub.s32 %s24, %s36
      %p102 = scmp.eq.s32.totalorder %s101, 0
      %s104 = sadd.s32 %s103, 1
      %s105 = scalar_select %p102, %s103, %s104
      %p108 = pneg %p102
      %p109 = scmp.eq.s32.totalorder %s17, 1
      %p110 = por %p108, %p109
      %p111 = scmp.ne.s32.totalorder %s103, %s106
      %p112 = scmp.eq.s32.totalorder %s17, 0
      %p113 = por %p111, %p112
      %p114 = scmp.ne.s32.totalorder %s103, %s106
      %p115 = scmp.eq.s32.totalorder %s22, 1
      %p116 = por %p114, %p115
      %p117 = scmp.ne.s32.totalorder %s106, %s107
      %p118 = scmp.eq.s32.totalorder %s22, 0
      %p119 = por %p117, %p118
      %p120 = scmp.ne.s32.totalorder %s106, %s107
      %p121 = scmp.eq.s32.totalorder %s23, 1
      %p122 = por %p120, %p121
      %p124 = scmp.ne.s32.totalorder %s107, %s123
      %p125 = scmp.eq.s32.totalorder %s23, 0
      %p126 = por %p124, %p125
      %s127 = ssub.s32 %s24, %s36
      %p128 = scmp.eq.s32.totalorder %s127, 0
      %s130 = sadd.s32 %s129, 1
      %s131 = scalar_select %p128, %s129, %s130
      %p134 = pneg %p128
      %p135 = scmp.eq.s32.totalorder %s17, 1
      %p136 = por %p134, %p135
      %p137 = scmp.ne.s32.totalorder %s129, %s132
      %p138 = scmp.eq.s32.totalorder %s17, 0
      %p139 = por %p137, %p138
      %p140 = scmp.ne.s32.totalorder %s129, %s132
      %p141 = scmp.eq.s32.totalorder %s22, 1
      %p142 = por %p140, %p141
      %p143 = scmp.ne.s32.totalorder %s132, %s133
      %p144 = scmp.eq.s32.totalorder %s22, 0
      %p145 = por %p143, %p144
      %p146 = scmp.ne.s32.totalorder %s132, %s133
      %p147 = scmp.eq.s32.totalorder %s23, 1
      %p148 = por %p146, %p147
      %p150 = scmp.ne.s32.totalorder %s133, %s149
      %p151 = scmp.eq.s32.totalorder %s23, 0
      %p152 = por %p150, %p151
      %p153 = scmp.le.s32.totalorder 1, %s17
      %p154 = scmp.lt.s32.totalorder %s17, 3
      %p155 = pnand %p153, %p154
      %p156 = pneg %p155
      // Predicated region
      $region9: #{tpu_custom_call.1} parent=5 // pred_check
        _
      $region10: #{tpu_custom_call.1} parent=5 // pred_check_branch
        %158 = sbr.rel (%p155) target = $region12
      $region11: #{tpu_custom_call.1} parent=5 // pred_region
        %s159 = ssub.s32 %s17, 1
      $region12: #{tpu_custom_call.1} parent=5 // pred_fallthru
        _
      %p160 = scmp.lt.s32.totalorder %s17, 2
      // Predicated region
      $region13: #{tpu_custom_call.1} parent=5 // pred_check
        %p161 = pneg %p160
      $region14: #{tpu_custom_call.1} parent=5 // pred_check_branch
        %163 = sbr.rel (%p161) target = $region16
      $region15: #{tpu_custom_call.1} parent=5 // pred_region
        // Predicated region
        $region17: #{tpu_custom_call.1} parent=15 // pred_check
          %p164 = pneg %p55
        $region18: #{tpu_custom_call.1} parent=15 // pred_check_branch
          %166 = sbr.rel (%p164) target = $region20
        $region19: #{tpu_custom_call.1} parent=15 // pred_region
          %s167 = sadd.s32 %s24, %s25
          %p168 = scmp.lt.s32.totalorder %s167, 1
          %s169 = scalar_select %p168, %s167, 1
          %s170 = smul.u32 8, %s169
          %p171 = scmp.lt.s32.totalorder %s170, 15
          %s172 = scalar_select %p171, %s170, 15
          %s173 = smul.addr %s172, 8
          %s174 = scalar_lea.vmem %s0, %s173
          %s175 = sadd.s32 %s24, %s25
          %p176 = scmp.lt.s32.totalorder %s175, 1
          %s177 = scalar_select %p176, %s175, 1
          %s178 = smul.u32 8, %s177
        $region20: #{tpu_custom_call.1} parent=15 // pred_fallthru
          _
        // Predicated region
        $region21: #{tpu_custom_call.1} parent=15 // pred_check
          %p179 = pneg %p87
        $region22: #{tpu_custom_call.1} parent=15 // pred_check_branch
          %181 = sbr.rel (%p179) target = $region24
        $region23: #{tpu_custom_call.1} parent=15 // pred_region
          %s182 = sadd.s32 %s24, %s25
          %p183 = scmp.lt.s32.totalorder %s182, 1
          %s184 = scalar_select %p183, %s182, 1
          %s185 = smul.u32 8, %s184
          %p186 = scmp.lt.s32.totalorder %s185, 15
          %s187 = scalar_select %p186, %s185, 15
          %s188 = smul.addr %s187, 8
          %s189 = scalar_lea.vmem %s1, %s188
          %s190 = sadd.s32 %s24, %s25
          %p191 = scmp.lt.s32.totalorder %s190, 1
          %s192 = scalar_select %p191, %s190, 1
          %s193 = smul.u32 8, %s192
        $region24: #{tpu_custom_call.1} parent=15 // pred_fallthru
          _
      $region16: #{tpu_custom_call.1} parent=5 // pred_fallthru
        _
      %p194 = scmp.le.s32.totalorder 1, %s17
      %p195 = scmp.lt.s32.totalorder %s17, 3
      %p196 = pnand %p194, %p195
      %p197 = pneg %p196
      // Predicated region
      $region25: #{tpu_custom_call.1} parent=5 // pred_check
        _
      $region26: #{tpu_custom_call.1} parent=5 // pred_check_branch
        %199 = sbr.rel (%p196) target = $region28
      $region27: #{tpu_custom_call.1} parent=5 // pred_region
        %s200 = ssub.s32 %s17, 1
        %s201 = sadd.s32 %s26, %s27
        %p202 = scmp.lt.s32.totalorder %s201, 1
        %s203 = scalar_select %p202, %s201, 1
        %s204 = smul.u32 8, %s203
        %p205 = scmp.lt.s32.totalorder %s204, 15
        %s206 = scalar_select %p205, %s204, 15
        %s207 = smul.addr %s206, 8
        %s208 = scalar_lea.vmem %s0, %s207
        %p209 = pneg %p61
        %p210 = pneg %p58
        %s211 = sadd.s32 %s26, %s27
        %p212 = scmp.lt.s32.totalorder %s211, 1
        %s213 = scalar_select %p212, %s211, 1
        %s214 = smul.u32 8, %s213
        %p215 = scmp.lt.s32.totalorder %s214, 15
        %s216 = scalar_select %p215, %s214, 15
        %s217 = smul.addr %s216, 8
        %s218 = scalar_lea.vmem %s1, %s217
        %p219 = pneg %p93
        %p220 = pneg %p90
        %p221 = pneg %p119
        %p222 = pneg %p116
        %s223 = sand.u32 %s106, 1
        %s224 = scalar_lea.sflag [#allocation6], %s223
        %s225 = sand.u32 %s106, 1
        %s226 = scalar_lea.vmem [#allocation5], %s225
        %p227 = pneg %p145
        %p228 = pneg %p142
        %s229 = sand.u32 %s132, 1
        %s230 = scalar_lea.sflag [#allocation8], %s229
        %s231 = sand.u32 %s132, 1
        %s232 = scalar_lea.vmem [#allocation7], %s231
        %s233 = sadd.s32 %s26, %s27
        %p234 = scmp.lt.s32.totalorder %s233, 1
        %s235 = scalar_select %p234, %s233, 1
        %s236 = smul.u32 8, %s235
        %p237 = scmp.lt.s32.totalorder %s236, 15
        %s238 = scalar_select %p237, %s236, 15
        %s239 = smul.addr %s238, 8
        %s240 = scalar_lea.vmem %s0, %s239
        %s241 = sadd.s32 %s26, %s27
        %p242 = scmp.lt.s32.totalorder %s241, 1
        %s243 = scalar_select %p242, %s241, 1
        %s244 = smul.u32 8, %s243
        %s245 = sadd.s32 %s26, %s27
        %p246 = scmp.lt.s32.totalorder %s245, 1
        %s247 = scalar_select %p246, %s245, 1
        %s248 = smul.u32 8, %s247
        %p249 = scmp.lt.s32.totalorder %s248, 15
        %s250 = scalar_select %p249, %s248, 15
        %s251 = smul.addr %s250, 8
        %s252 = scalar_lea.vmem %s1, %s251
        %s253 = sadd.s32 %s26, %s27
        %p254 = scmp.lt.s32.totalorder %s253, 1
        %s255 = scalar_select %p254, %s253, 1
        %s256 = smul.u32 8, %s255
        %p258 = scmp.eq.s32.totalorder %s27, 0
        // Predicated region
        $region29: #{tpu_custom_call.1} parent=27 // pred_check
          %p259 = pneg %p258
        $region30: #{tpu_custom_call.1} parent=27 // pred_check_branch
          %261 = sbr.rel (%p259) target = $region32
        $region31: #{tpu_custom_call.1} parent=27 // pred_region
          $region33: #{tpu_custom_call.1} parent=31
            #allocation9 [shape = 's32[1]{0}', space=sflag, size = 0x4, scoped, tag = 'scoped memory for tpu_custom_call.1']
            // Predicated region
            $region34: #{tpu_custom_call.1} parent=33 // pred_check
              _
            $region35: #{tpu_custom_call.1} parent=33 // pred_check_branch
              %263 = sbr.rel (0) target = $region37
            $region36: #{tpu_custom_call.1} parent=33 // pred_region
              loop: start=0, step=1, limit=1
              $region38: #{tpu_custom_call.1} parent=36 // loop_pre_header
                _
              $region39: #{tpu_custom_call.1} parent=36 // loop_header
                %s265 = sphi 0, %s269
                %p266 = scmp.ge.s32.totalorder %s265, 1
                %s270 = sphi %s2, %s2
                %s271 = sphi [#allocation2], [#allocation2]
              $region40: #{tpu_custom_call.1} parent=36 // loop_header_branch
                %268 = sbr.rel (%p266) target = $region44
              $region41: #{tpu_custom_call.1} parent=36 // loop_body
                %v272 = vld [vmem:[%s270] sm:$0xff]
                %273 = vst [vmem:[%s271] sm:$0xff] %v272
                %v274 = vld [vmem:[%s270 + $0x8] sm:$0xff]
                %275 = vst [vmem:[%s271 + $0x8] sm:$0xff] %v274
              $region42: #{tpu_custom_call.1} parent=36 // loop_footer
                %s269 = sadd.s32 1, %s265
              $region43: #{tpu_custom_call.1} parent=36 // loop_footer_branch
                %264 = sbr.rel target = $region39
              $region44: #{tpu_custom_call.1} parent=36 // loop_exit
                _
            $region37: #{tpu_custom_call.1} parent=33 // pred_fallthru
              _
            // Predicated region
            $region45: #{tpu_custom_call.1} parent=33 // pred_check
              _
            $region46: #{tpu_custom_call.1} parent=33 // pred_check_branch
              %277 = sbr.rel target = $region48
            $region47: #{tpu_custom_call.1} parent=33 // pred_region
              _
            $region48: #{tpu_custom_call.1} parent=33 // pred_fallthru
              _
            // Predicated region
            $region49: #{tpu_custom_call.1} parent=33 // pred_check
              _
            $region50: #{tpu_custom_call.1} parent=33 // pred_check_branch
              %280 = sbr.rel (0) target = $region52
            $region51: #{tpu_custom_call.1} parent=33 // pred_region
              %281 = vsyncadd [#allocation9], 256
            $region52: #{tpu_custom_call.1} parent=33 // pred_fallthru
              _
            %s282 = smul.u32 4, 2
            %s283 = smul.u32 %s282, 2
            %s284 = sshll.u32 %s283, 4
            %285 = dma.done [#allocation9], %s284
          %286 = vst [vmem:[#allocation3] sm:$0xff] 0.0
          %287 = vst [vmem:[#allocation3 + $0x8] sm:$0xff] 0.0
          %288 = vst [vmem:[#allocation3 + $0x10] sm:$0xff] 0.0
          %289 = vst [vmem:[#allocation3 + $0x18] sm:$0xff] 0.0
          %290 = vst [vmem:[#allocation3 + $0x20] sm:$0xff] 0.0
          %291 = vst [vmem:[#allocation3 + $0x28] sm:$0xff] 0.0
          %292 = vst [vmem:[#allocation3 + $0x30] sm:$0xff] 0.0
          %293 = vst [vmem:[#allocation3 + $0x38] sm:$0xff] 0.0
          %294 = vst [vmem:[#allocation4] sm:$0xff] 0.0
          %295 = vst [vmem:[#allocation4 + $0x8] sm:$0xff] 0.0
          %296 = vst [vmem:[#allocation4 + $0x10] sm:$0xff] 0.0
          %297 = vst [vmem:[#allocation4 + $0x18] sm:$0xff] 0.0
          %298 = vst [vmem:[#allocation4 + $0x20] sm:$0xff] 0.0
          %299 = vst [vmem:[#allocation4 + $0x28] sm:$0xff] 0.0
          %300 = vst [vmem:[#allocation4 + $0x30] sm:$0xff] 0.0
          %301 = vst [vmem:[#allocation4 + $0x38] sm:$0xff] 0.0
        $region32: #{tpu_custom_call.1} parent=27 // pred_fallthru
          _
        %v302 = vld [vmem:[%s240] sm:$0xff]
        %v303 = vld [vmem:[%s240 + $0x8] sm:$0xff]
        %v304 = vld [vmem:[%s240 + $0x10] sm:$0xff]
        %v305 = vld [vmem:[%s240 + $0x18] sm:$0xff]
        %v306 = vld [vmem:[%s240 + $0x20] sm:$0xff]
        %v307 = vld [vmem:[%s240 + $0x28] sm:$0xff]
        %v308 = vld [vmem:[%s240 + $0x30] sm:$0xff]
        %v309 = vld [vmem:[%s240 + $0x38] sm:$0xff]
        %v310 = vld [vmem:[%s252] sm:$0xff]
        %v311 = vld [vmem:[%s252 + $0x8] sm:$0xff]
        %v312 = vld [vmem:[%s252 + $0x10] sm:$0xff]
        %v313 = vld [vmem:[%s252 + $0x18] sm:$0xff]
        %v314 = vld [vmem:[%s252 + $0x20] sm:$0xff]
        %v315 = vld [vmem:[%s252 + $0x28] sm:$0xff]
        %v316 = vld [vmem:[%s252 + $0x30] sm:$0xff]
        %v317 = vld [vmem:[%s252 + $0x38] sm:$0xff]
        %v318 = vsub.f32 %v302, %v310
        %v319 = vsub.f32 %v303, %v311
        %v320 = vsub.f32 %v304, %v312
        %v321 = vsub.f32 %v305, %v313
        %v322 = vsub.f32 %v306, %v314
        %v323 = vsub.f32 %v307, %v315
        %v324 = vsub.f32 %v308, %v316
        %v325 = vsub.f32 %v309, %v317
        %v326 = vpack.c.bf16 %v319, %v318
        %v327 = vpack.c.bf16 %v321, %v320
        %v328 = vpack.c.bf16 %v323, %v322
        %v329 = vpack.c.bf16 %v325, %v324
        %v330 = vld [vmem:[#allocation2] sm:$0xff]
        %v331 = vld [vmem:[#allocation2 + $0x8] sm:$0xff]
        %v334 = vunpack.c.l.b16 %v330
        %v335 = vunpack.c.h.b16 %v330
        %v336 = vunpack.c.l.b16 %v331
        %v337 = vunpack.c.h.b16 %v331
        %v338 = vpack.c.b16 %v336, %v334
        %v339 = vpack.c.b16 %v337, %v335
        %vm342 = vcmask 130048
        %v344 = vsel %vm342, %v326, 0
        %v347 = vsel %vm342, %v327, 0
        %v350 = vsel %vm342, %v328, 0
        %v353 = vsel %vm342, %v329, 0
        %355 = vmatpush.bf16.msra.mxu0 0
        %356 = vmatpush.bf16.msra.mxu0 0
        %357 = vmatpush.bf16.msra.mxu0 0
        %358 = vmatpush.bf16.msra.mxu0 0
        %359 = vmatpush.bf16.msra.mxu0 0
        %360 = vmatpush.bf16.msra.mxu0 0
        %361 = vmatpush.bf16.msra.mxu0 0
        %362 = vmatpush.bf16.msra.mxu0 %v338
        %363 = vmatmul.bf16.gmra.mxu0 %v344
        %v364 = vpop.f32.mrf.mxu0
        %v365 = vadd.f32 0.0, %v364
        %v366 = vpop.f32.mrf.mxu0
        %v367 = vadd.f32 0.0, %v366
        %368 = vmatmul.bf16.gmra.mxu0 %v347
        %v369 = vpop.f32.mrf.mxu0
        %v370 = vadd.f32 0.0, %v369
        %v371 = vpop.f32.mrf.mxu0
        %v372 = vadd.f32 0.0, %v371
        %373 = vmatmul.bf16.gmra.mxu0 %v350
        %v374 = vpop.f32.mrf.mxu0
        %v375 = vadd.f32 0.0, %v374
        %v376 = vpop.f32.mrf.mxu0
        %v377 = vadd.f32 0.0, %v376
        %378 = vmatmul.bf16.gmra.mxu0 %v353
        %v379 = vpop.f32.mrf.mxu0
        %v380 = vadd.f32 0.0, %v379
        %v381 = vpop.f32.mrf.mxu0
        %v382 = vadd.f32 0.0, %v381
        %383 = vdwg.mxu0
        %384 = vmatpush.bf16.msra.mxu0 0
        %385 = vmatpush.bf16.msra.mxu0 0
        %386 = vmatpush.bf16.msra.mxu0 0
        %387 = vmatpush.bf16.msra.mxu0 0
        %388 = vmatpush.bf16.msra.mxu0 0
        %389 = vmatpush.bf16.msra.mxu0 0
        %390 = vmatpush.bf16.msra.mxu0 0
        %391 = vmatpush.bf16.msra.mxu0 %v339
        %392 = vmatmul.bf16.gmra.mxu0 %v344
        %v393 = vpop.f32.mrf.mxu0
        %v394 = vadd.f32 0.0, %v393
        %v395 = vpop.f32.mrf.mxu0
        %v396 = vadd.f32 0.0, %v395
        %397 = vmatmul.bf16.gmra.mxu0 %v347
        %v398 = vpop.f32.mrf.mxu0
        %v399 = vadd.f32 0.0, %v398
        %v400 = vpop.f32.mrf.mxu0
        %v401 = vadd.f32 0.0, %v400
        %402 = vmatmul.bf16.gmra.mxu0 %v350
        %v403 = vpop.f32.mrf.mxu0
        %v404 = vadd.f32 0.0, %v403
        %v405 = vpop.f32.mrf.mxu0
        %v406 = vadd.f32 0.0, %v405
        %407 = vmatmul.bf16.gmra.mxu0 %v353
        %v408 = vpop.f32.mrf.mxu0
        %v409 = vadd.f32 0.0, %v408
        %v410 = vpop.f32.mrf.mxu0
        %v411 = vadd.f32 0.0, %v410
        %412 = vdwg.mxu0
        %v413 = vmul.f32 %v365, %v365
        %v414 = vmul.f32 %v367, %v367
        %v415 = vmul.f32 %v370, %v370
        %v416 = vmul.f32 %v372, %v372
        %v417 = vmul.f32 %v375, %v375
        %v418 = vmul.f32 %v377, %v377
        %v419 = vmul.f32 %v380, %v380
        %v420 = vmul.f32 %v382, %v382
        %v421 = vmul.f32 %v394, %v394
        %v422 = vmul.f32 %v396, %v396
        %v423 = vmul.f32 %v399, %v399
        %v424 = vmul.f32 %v401, %v401
        %v425 = vmul.f32 %v404, %v404
        %v426 = vmul.f32 %v406, %v406
        %v427 = vmul.f32 %v409, %v409
        %v428 = vmul.f32 %v411, %v411
        %v429 = vsub.f32 %v413, %v421
        %v430 = vsub.f32 %v414, %v422
        %v431 = vsub.f32 %v415, %v423
        %v432 = vsub.f32 %v416, %v424
        %v433 = vsub.f32 %v417, %v425
        %v434 = vsub.f32 %v418, %v426
        %v435 = vsub.f32 %v419, %v427
        %v436 = vsub.f32 %v420, %v428
        %v437 = vadd.f32 %v429, 1e-06
        %v438 = vadd.f32 %v430, 1e-06
        %v439 = vadd.f32 %v431, 1e-06
        %v440 = vadd.f32 %v432, 1e-06
        %v441 = vadd.f32 %v433, 1e-06
        %v442 = vadd.f32 %v434, 1e-06
        %v443 = vadd.f32 %v435, 1e-06
        %v444 = vadd.f32 %v436, 1e-06
        %v445 = vmul.f32 %v365, 2.0
        %v446 = vmul.f32 %v367, 2.0
        %v447 = vmul.f32 %v370, 2.0
        %v448 = vmul.f32 %v372, 2.0
        %v449 = vmul.f32 %v375, 2.0
        %v450 = vmul.f32 %v377, 2.0
        %v451 = vmul.f32 %v380, 2.0
        %v452 = vmul.f32 %v382, 2.0
        %v453 = vmul.f32 %v445, %v394
        %v454 = vmul.f32 %v446, %v396
        %v455 = vmul.f32 %v447, %v399
        %v456 = vmul.f32 %v448, %v401
        %v457 = vmul.f32 %v449, %v404
        %v458 = vmul.f32 %v450, %v406
        %v459 = vmul.f32 %v451, %v409
        %v460 = vmul.f32 %v452, %v411
        %v461 = vmul.f32 %v437, %v437
        %v462 = vmul.f32 %v438, %v438
        %v463 = vmul.f32 %v439, %v439
        %v464 = vmul.f32 %v440, %v440
        %v465 = vmul.f32 %v441, %v441
        %v466 = vmul.f32 %v442, %v442
        %v467 = vmul.f32 %v443, %v443
        %v468 = vmul.f32 %v444, %v444
        %v469 = vmul.f32 %v453, %v453
        %v470 = vmul.f32 %v454, %v454
        %v471 = vmul.f32 %v455, %v455
        %v472 = vmul.f32 %v456, %v456
        %v473 = vmul.f32 %v457, %v457
        %v474 = vmul.f32 %v458, %v458
        %v475 = vmul.f32 %v459, %v459
        %v476 = vmul.f32 %v460, %v460
        %v477 = vadd.f32 %v461, %v469
        %v478 = vadd.f32 %v462, %v470
        %v479 = vadd.f32 %v463, %v471
        %v480 = vadd.f32 %v464, %v472
        %v481 = vadd.f32 %v465, %v473
        %v482 = vadd.f32 %v466, %v474
        %v483 = vadd.f32 %v467, %v475
        %v484 = vadd.f32 %v468, %v476
        %v485 = vrsqrt.pop %v477
        %v486 = vmul.f32 %v485, %v477
        %v487 = vmul.f32 %v486, %v485
        %v488 = vmul.f32 0.5, %v487
        %v489 = vsub.f32 1.5, %v488
        %v490 = vmul.f32 %v485, %v489
        %v491 = vmul.f32 %v477, %v490
        %vm492 = vcmp.eq.f32.partialorder %v477, inf
        %v493 = vsel %vm492, %v477, %v491
        %vm494 = vcmp.eq.f32.partialorder %v477, 0.0
        %v495 = vand.u32 %v477, 2147483648
        %v496 = vsel %vm494, %v495, %v493
        %v497 = vrsqrt.pop %v478
        %v498 = vmul.f32 %v497, %v478
        %v499 = vmul.f32 %v498, %v497
        %v500 = vmul.f32 0.5, %v499
        %v501 = vsub.f32 1.5, %v500
        %v502 = vmul.f32 %v497, %v501
        %v503 = vmul.f32 %v478, %v502
        %vm504 = vcmp.eq.f32.partialorder %v478, inf
        %v505 = vsel %vm504, %v478, %v503
        %vm506 = vcmp.eq.f32.partialorder %v478, 0.0
        %v507 = vand.u32 %v478, 2147483648
        %v508 = vsel %vm506, %v507, %v505
        %v509 = vrsqrt.pop %v479
        %v510 = vmul.f32 %v509, %v479
        %v511 = vmul.f32 %v510, %v509
        %v512 = vmul.f32 0.5, %v511
        %v513 = vsub.f32 1.5, %v512
        %v514 = vmul.f32 %v509, %v513
        %v515 = vmul.f32 %v479, %v514
        %vm516 = vcmp.eq.f32.partialorder %v479, inf
        %v517 = vsel %vm516, %v479, %v515
        %vm518 = vcmp.eq.f32.partialorder %v479, 0.0
        %v519 = vand.u32 %v479, 2147483648
        %v520 = vsel %vm518, %v519, %v517
        %v521 = vrsqrt.pop %v480
        %v522 = vmul.f32 %v521, %v480
        %v523 = vmul.f32 %v522, %v521
        %v524 = vmul.f32 0.5, %v523
        %v525 = vsub.f32 1.5, %v524
        %v526 = vmul.f32 %v521, %v525
        %v527 = vmul.f32 %v480, %v526
        %vm528 = vcmp.eq.f32.partialorder %v480, inf
        %v529 = vsel %vm528, %v480, %v527
        %vm530 = vcmp.eq.f32.partialorder %v480, 0.0
        %v531 = vand.u32 %v480, 2147483648
        %v532 = vsel %vm530, %v531, %v529
        %v533 = vrsqrt.pop %v481
        %v534 = vmul.f32 %v533, %v481
        %v535 = vmul.f32 %v534, %v533
        %v536 = vmul.f32 0.5, %v535
        %v537 = vsub.f32 1.5, %v536
        %v538 = vmul.f32 %v533, %v537
        %v539 = vmul.f32 %v481, %v538
        %vm540 = vcmp.eq.f32.partialorder %v481, inf
        %v541 = vsel %vm540, %v481, %v539
        %vm542 = vcmp.eq.f32.partialorder %v481, 0.0
        %v543 = vand.u32 %v481, 2147483648
        %v544 = vsel %vm542, %v543, %v541
        %v545 = vrsqrt.pop %v482
        %v546 = vmul.f32 %v545, %v482
        %v547 = vmul.f32 %v546, %v545
        %v548 = vmul.f32 0.5, %v547
        %v549 = vsub.f32 1.5, %v548
        %v550 = vmul.f32 %v545, %v549
        %v551 = vmul.f32 %v482, %v550
        %vm552 = vcmp.eq.f32.partialorder %v482, inf
        %v553 = vsel %vm552, %v482, %v551
        %vm554 = vcmp.eq.f32.partialorder %v482, 0.0
        %v555 = vand.u32 %v482, 2147483648
        %v556 = vsel %vm554, %v555, %v553
        %v557 = vrsqrt.pop %v483
        %v558 = vmul.f32 %v557, %v483
        %v559 = vmul.f32 %v558, %v557
        %v560 = vmul.f32 0.5, %v559
        %v561 = vsub.f32 1.5, %v560
        %v562 = vmul.f32 %v557, %v561
        %v563 = vmul.f32 %v483, %v562
        %vm564 = vcmp.eq.f32.partialorder %v483, inf
        %v565 = vsel %vm564, %v483, %v563
        %vm566 = vcmp.eq.f32.partialorder %v483, 0.0
        %v567 = vand.u32 %v483, 2147483648
        %v568 = vsel %vm566, %v567, %v565
        %v569 = vrsqrt.pop %v484
        %v570 = vmul.f32 %v569, %v484
        %v571 = vmul.f32 %v570, %v569
        %v572 = vmul.f32 0.5, %v571
        %v573 = vsub.f32 1.5, %v572
        %v574 = vmul.f32 %v569, %v573
        %v575 = vmul.f32 %v484, %v574
        %vm576 = vcmp.eq.f32.partialorder %v484, inf
        %v577 = vsel %vm576, %v484, %v575
        %vm578 = vcmp.eq.f32.partialorder %v484, 0.0
        %v579 = vand.u32 %v484, 2147483648
        %v580 = vsel %vm578, %v579, %v577
        %v581 = vadd.f32 %v496, %v437
        %v582 = vadd.f32 %v508, %v438
        %v583 = vadd.f32 %v520, %v439
        %v584 = vadd.f32 %v532, %v440
        %v585 = vadd.f32 %v544, %v441
        %v586 = vadd.f32 %v556, %v442
        %v587 = vadd.f32 %v568, %v443
        %v588 = vadd.f32 %v580, %v444
        %v589 = vmul.f32 %v581, 0.5
        %v590 = vmul.f32 %v582, 0.5
        %v591 = vmul.f32 %v583, 0.5
        %v592 = vmul.f32 %v584, 0.5
        %v593 = vmul.f32 %v585, 0.5
        %v594 = vmul.f32 %v586, 0.5
        %v595 = vmul.f32 %v587, 0.5
        %v596 = vmul.f32 %v588, 0.5
        %v597 = vmax.f32 %v589, 0.0
        %v598 = vmax.f32 %v590, 0.0
        %v599 = vmax.f32 %v591, 0.0
        %v600 = vmax.f32 %v592, 0.0
        %v601 = vmax.f32 %v593, 0.0
        %v602 = vmax.f32 %v594, 0.0
        %v603 = vmax.f32 %v595, 0.0
        %v604 = vmax.f32 %v596, 0.0
        %v605 = vrsqrt.pop %v597
        %v606 = vmul.f32 %v605, %v597
        %v607 = vmul.f32 %v606, %v605
        %v608 = vmul.f32 0.5, %v607
        %v609 = vsub.f32 1.5, %v608
        %v610 = vmul.f32 %v605, %v609
        %v611 = vmul.f32 %v597, %v610
        %vm612 = vcmp.eq.f32.partialorder %v597, inf
        %v613 = vsel %vm612, %v597, %v611
        %vm614 = vcmp.eq.f32.partialorder %v597, 0.0
        %v615 = vand.u32 %v597, 2147483648
        %v616 = vsel %vm614, %v615, %v613
        %v617 = vrsqrt.pop %v598
        %v618 = vmul.f32 %v617, %v598
        %v619 = vmul.f32 %v618, %v617
        %v620 = vmul.f32 0.5, %v619
        %v621 = vsub.f32 1.5, %v620
        %v622 = vmul.f32 %v617, %v621
        %v623 = vmul.f32 %v598, %v622
        %vm624 = vcmp.eq.f32.partialorder %v598, inf
        %v625 = vsel %vm624, %v598, %v623
        %vm626 = vcmp.eq.f32.partialorder %v598, 0.0
        %v627 = vand.u32 %v598, 2147483648
        %v628 = vsel %vm626, %v627, %v625
        %v629 = vrsqrt.pop %v599
        %v630 = vmul.f32 %v629, %v599
        %v631 = vmul.f32 %v630, %v629
        %v632 = vmul.f32 0.5, %v631
        %v633 = vsub.f32 1.5, %v632
        %v634 = vmul.f32 %v629, %v633
        %v635 = vmul.f32 %v599, %v634
        %vm636 = vcmp.eq.f32.partialorder %v599, inf
        %v637 = vsel %vm636, %v599, %v635
        %vm638 = vcmp.eq.f32.partialorder %v599, 0.0
        %v639 = vand.u32 %v599, 2147483648
        %v640 = vsel %vm638, %v639, %v637
        %v641 = vrsqrt.pop %v600
        %v642 = vmul.f32 %v641, %v600
        %v643 = vmul.f32 %v642, %v641
        %v644 = vmul.f32 0.5, %v643
        %v645 = vsub.f32 1.5, %v644
        %v646 = vmul.f32 %v641, %v645
        %v647 = vmul.f32 %v600, %v646
        %vm648 = vcmp.eq.f32.partialorder %v600, inf
        %v649 = vsel %vm648, %v600, %v647
        %vm650 = vcmp.eq.f32.partialorder %v600, 0.0
        %v651 = vand.u32 %v600, 2147483648
        %v652 = vsel %vm650, %v651, %v649
        %v653 = vrsqrt.pop %v601
        %v654 = vmul.f32 %v653, %v601
        %v655 = vmul.f32 %v654, %v653
        %v656 = vmul.f32 0.5, %v655
        %v657 = vsub.f32 1.5, %v656
        %v658 = vmul.f32 %v653, %v657
        %v659 = vmul.f32 %v601, %v658
        %vm660 = vcmp.eq.f32.partialorder %v601, inf
        %v661 = vsel %vm660, %v601, %v659
        %vm662 = vcmp.eq.f32.partialorder %v601, 0.0
        %v663 = vand.u32 %v601, 2147483648
        %v664 = vsel %vm662, %v663, %v661
        %v665 = vrsqrt.pop %v602
        %v666 = vmul.f32 %v665, %v602
        %v667 = vmul.f32 %v666, %v665
        %v668 = vmul.f32 0.5, %v667
        %v669 = vsub.f32 1.5, %v668
        %v670 = vmul.f32 %v665, %v669
        %v671 = vmul.f32 %v602, %v670
        %vm672 = vcmp.eq.f32.partialorder %v602, inf
        %v673 = vsel %vm672, %v602, %v671
        %vm674 = vcmp.eq.f32.partialorder %v602, 0.0
        %v675 = vand.u32 %v602, 2147483648
        %v676 = vsel %vm674, %v675, %v673
        %v677 = vrsqrt.pop %v603
        %v678 = vmul.f32 %v677, %v603
        %v679 = vmul.f32 %v678, %v677
        %v680 = vmul.f32 0.5, %v679
        %v681 = vsub.f32 1.5, %v680
        %v682 = vmul.f32 %v677, %v681
        %v683 = vmul.f32 %v603, %v682
        %vm684 = vcmp.eq.f32.partialorder %v603, inf
        %v685 = vsel %vm684, %v603, %v683
        %vm686 = vcmp.eq.f32.partialorder %v603, 0.0
        %v687 = vand.u32 %v603, 2147483648
        %v688 = vsel %vm686, %v687, %v685
        %v689 = vrsqrt.pop %v604
        %v690 = vmul.f32 %v689, %v604
        %v691 = vmul.f32 %v690, %v689
        %v692 = vmul.f32 0.5, %v691
        %v693 = vsub.f32 1.5, %v692
        %v694 = vmul.f32 %v689, %v693
        %v695 = vmul.f32 %v604, %v694
        %vm696 = vcmp.eq.f32.partialorder %v604, inf
        %v697 = vsel %vm696, %v604, %v695
        %vm698 = vcmp.eq.f32.partialorder %v604, 0.0
        %v699 = vand.u32 %v604, 2147483648
        %v700 = vsel %vm698, %v699, %v697
        %vm701 = vcmp.ge.f32.partialorder %v453, 0.0
        %vm702 = vcmp.ge.f32.partialorder %v454, 0.0
        %vm703 = vcmp.ge.f32.partialorder %v455, 0.0
        %vm704 = vcmp.ge.f32.partialorder %v456, 0.0
        %vm705 = vcmp.ge.f32.partialorder %v457, 0.0
        %vm706 = vcmp.ge.f32.partialorder %v458, 0.0
        %vm707 = vcmp.ge.f32.partialorder %v459, 0.0
        %vm708 = vcmp.ge.f32.partialorder %v460, 0.0
        %v709 = vsel %vm701, 1.0, -1.0
        %v710 = vsel %vm702, 1.0, -1.0
        %v711 = vsel %vm703, 1.0, -1.0
        %v712 = vsel %vm704, 1.0, -1.0
        %v713 = vsel %vm705, 1.0, -1.0
        %v714 = vsel %vm706, 1.0, -1.0
        %v715 = vsel %vm707, 1.0, -1.0
        %v716 = vsel %vm708, 1.0, -1.0
        %v717 = vsub.f32 %v496, %v437
        %v718 = vsub.f32 %v508, %v438
        %v719 = vsub.f32 %v520, %v439
        %v720 = vsub.f32 %v532, %v440
        %v721 = vsub.f32 %v544, %v441
        %v722 = vsub.f32 %v556, %v442
        %v723 = vsub.f32 %v568, %v443
        %v724 = vsub.f32 %v580, %v444
        %v725 = vmul.f32 %v717, 0.5
        %v726 = vmul.f32 %v718, 0.5
        %v727 = vmul.f32 %v719, 0.5
        %v728 = vmul.f32 %v720, 0.5
        %v729 = vmul.f32 %v721, 0.5
        %v730 = vmul.f32 %v722, 0.5
        %v731 = vmul.f32 %v723, 0.5
        %v732 = vmul.f32 %v724, 0.5
        %v733 = vmax.f32 %v725, 0.0
        %v734 = vmax.f32 %v726, 0.0
        %v735 = vmax.f32 %v727, 0.0
        %v736 = vmax.f32 %v728, 0.0
        %v737 = vmax.f32 %v729, 0.0
        %v738 = vmax.f32 %v730, 0.0
        %v739 = vmax.f32 %v731, 0.0
        %v740 = vmax.f32 %v732, 0.0
        %v741 = vrsqrt.pop %v733
        %v742 = vmul.f32 %v741, %v733
        %v743 = vmul.f32 %v742, %v741
        %v744 = vmul.f32 0.5, %v743
        %v745 = vsub.f32 1.5, %v744
        %v746 = vmul.f32 %v741, %v745
        %v747 = vmul.f32 %v733, %v746
        %vm748 = vcmp.eq.f32.partialorder %v733, inf
        %v749 = vsel %vm748, %v733, %v747
        %vm750 = vcmp.eq.f32.partialorder %v733, 0.0
        %v751 = vand.u32 %v733, 2147483648
        %v752 = vsel %vm750, %v751, %v749
        %v753 = vrsqrt.pop %v734
        %v754 = vmul.f32 %v753, %v734
        %v755 = vmul.f32 %v754, %v753
        %v756 = vmul.f32 0.5, %v755
        %v757 = vsub.f32 1.5, %v756
        %v758 = vmul.f32 %v753, %v757
        %v759 = vmul.f32 %v734, %v758
        %vm760 = vcmp.eq.f32.partialorder %v734, inf
        %v761 = vsel %vm760, %v734, %v759
        %vm762 = vcmp.eq.f32.partialorder %v734, 0.0
        %v763 = vand.u32 %v734, 2147483648
        %v764 = vsel %vm762, %v763, %v761
        %v765 = vrsqrt.pop %v735
        %v766 = vmul.f32 %v765, %v735
        %v767 = vmul.f32 %v766, %v765
        %v768 = vmul.f32 0.5, %v767
        %v769 = vsub.f32 1.5, %v768
        %v770 = vmul.f32 %v765, %v769
        %v771 = vmul.f32 %v735, %v770
        %vm772 = vcmp.eq.f32.partialorder %v735, inf
        %v773 = vsel %vm772, %v735, %v771
        %vm774 = vcmp.eq.f32.partialorder %v735, 0.0
        %v775 = vand.u32 %v735, 2147483648
        %v776 = vsel %vm774, %v775, %v773
        %v777 = vrsqrt.pop %v736
        %v778 = vmul.f32 %v777, %v736
        %v779 = vmul.f32 %v778, %v777
        %v780 = vmul.f32 0.5, %v779
        %v781 = vsub.f32 1.5, %v780
        %v782 = vmul.f32 %v777, %v781
        %v783 = vmul.f32 %v736, %v782
        %vm784 = vcmp.eq.f32.partialorder %v736, inf
        %v785 = vsel %vm784, %v736, %v783
        %vm786 = vcmp.eq.f32.partialorder %v736, 0.0
        %v787 = vand.u32 %v736, 2147483648
        %v788 = vsel %vm786, %v787, %v785
        %v789 = vrsqrt.pop %v737
        %v790 = vmul.f32 %v789, %v737
        %v791 = vmul.f32 %v790, %v789
        %v792 = vmul.f32 0.5, %v791
        %v793 = vsub.f32 1.5, %v792
        %v794 = vmul.f32 %v789, %v793
        %v795 = vmul.f32 %v737, %v794
        %vm796 = vcmp.eq.f32.partialorder %v737, inf
        %v797 = vsel %vm796, %v737, %v795
        %vm798 = vcmp.eq.f32.partialorder %v737, 0.0
        %v799 = vand.u32 %v737, 2147483648
        %v800 = vsel %vm798, %v799, %v797
        %v801 = vrsqrt.pop %v738
        %v802 = vmul.f32 %v801, %v738
        %v803 = vmul.f32 %v802, %v801
        %v804 = vmul.f32 0.5, %v803
        %v805 = vsub.f32 1.5, %v804
        %v806 = vmul.f32 %v801, %v805
        %v807 = vmul.f32 %v738, %v806
        %vm808 = vcmp.eq.f32.partialorder %v738, inf
        %v809 = vsel %vm808, %v738, %v807
        %vm810 = vcmp.eq.f32.partialorder %v738, 0.0
        %v811 = vand.u32 %v738, 2147483648
        %v812 = vsel %vm810, %v811, %v809
        %v813 = vrsqrt.pop %v739
        %v814 = vmul.f32 %v813, %v739
        %v815 = vmul.f32 %v814, %v813
        %v816 = vmul.f32 0.5, %v815
        %v817 = vsub.f32 1.5, %v816
        %v818 = vmul.f32 %v813, %v817
        %v819 = vmul.f32 %v739, %v818
        %vm820 = vcmp.eq.f32.partialorder %v739, inf
        %v821 = vsel %vm820, %v739, %v819
        %vm822 = vcmp.eq.f32.partialorder %v739, 0.0
        %v823 = vand.u32 %v739, 2147483648
        %v824 = vsel %vm822, %v823, %v821
        %v825 = vrsqrt.pop %v740
        %v826 = vmul.f32 %v825, %v740
        %v827 = vmul.f32 %v826, %v825
        %v828 = vmul.f32 0.5, %v827
        %v829 = vsub.f32 1.5, %v828
        %v830 = vmul.f32 %v825, %v829
        %v831 = vmul.f32 %v740, %v830
        %vm832 = vcmp.eq.f32.partialorder %v740, inf
        %v833 = vsel %vm832, %v740, %v831
        %vm834 = vcmp.eq.f32.partialorder %v740, 0.0
        %v835 = vand.u32 %v740, 2147483648
        %v836 = vsel %vm834, %v835, %v833
        %v837 = vmul.f32 %v709, %v752
        %v838 = vmul.f32 %v710, %v764
        %v839 = vmul.f32 %v711, %v776
        %v840 = vmul.f32 %v712, %v788
        %v841 = vmul.f32 %v713, %v800
        %v842 = vmul.f32 %v714, %v812
        %v843 = vmul.f32 %v715, %v824
        %v844 = vmul.f32 %v716, %v836
        %s845 = sadd.s32 %s26, %s27
        %s846 = smul.u32 %s845, 64
        %s847 = sadd.s32 %s846, 64
        %p848 = scmp.le.s32.totalorder %s847, 128
        // Predicated region
        $region53: #{tpu_custom_call.1} parent=27 // pred_check
          %p849 = pneg %p848
        $region54: #{tpu_custom_call.1} parent=27 // pred_check_branch
          %851 = sbr.rel (%p849) target = $region56
        $region55: #{tpu_custom_call.1} parent=27 // pred_region
          %v852 = vld [vmem:[#allocation3] sm:$0xff]
          %v853 = vld [vmem:[#allocation3 + $0x8] sm:$0xff]
          %v854 = vld [vmem:[#allocation3 + $0x10] sm:$0xff]
          %v855 = vld [vmem:[#allocation3 + $0x18] sm:$0xff]
          %v856 = vld [vmem:[#allocation3 + $0x20] sm:$0xff]
          %v857 = vld [vmem:[#allocation3 + $0x28] sm:$0xff]
          %v858 = vld [vmem:[#allocation3 + $0x30] sm:$0xff]
          %v859 = vld [vmem:[#allocation3 + $0x38] sm:$0xff]
          %v860 = vadd.f32 %v852, %v616
          %v861 = vadd.f32 %v853, %v628
          %v862 = vadd.f32 %v854, %v640
          %v863 = vadd.f32 %v855, %v652
          %v864 = vadd.f32 %v856, %v664
          %v865 = vadd.f32 %v857, %v676
          %v866 = vadd.f32 %v858, %v688
          %v867 = vadd.f32 %v859, %v700
          %868 = vst [vmem:[#allocation3] sm:$0xff] %v860
          %869 = vst [vmem:[#allocation3 + $0x8] sm:$0xff] %v861
          %870 = vst [vmem:[#allocation3 + $0x10] sm:$0xff] %v862
          %871 = vst [vmem:[#allocation3 + $0x18] sm:$0xff] %v863
          %872 = vst [vmem:[#allocation3 + $0x20] sm:$0xff] %v864
          %873 = vst [vmem:[#allocation3 + $0x28] sm:$0xff] %v865
          %874 = vst [vmem:[#allocation3 + $0x30] sm:$0xff] %v866
          %875 = vst [vmem:[#allocation3 + $0x38] sm:$0xff] %v867
          %v876 = vld [vmem:[#allocation4] sm:$0xff]
          %v877 = vld [vmem:[#allocation4 + $0x8] sm:$0xff]
          %v878 = vld [vmem:[#allocation4 + $0x10] sm:$0xff]
          %v879 = vld [vmem:[#allocation4 + $0x18] sm:$0xff]
          %v880 = vld [vmem:[#allocation4 + $0x20] sm:$0xff]
          %v881 = vld [vmem:[#allocation4 + $0x28] sm:$0xff]
          %v882 = vld [vmem:[#allocation4 + $0x30] sm:$0xff]
          %v883 = vld [vmem:[#allocation4 + $0x38] sm:$0xff]
          %v884 = vadd.f32 %v876, %v837
          %v885 = vadd.f32 %v877, %v838
          %v886 = vadd.f32 %v878, %v839
          %v887 = vadd.f32 %v879, %v840
          %v888 = vadd.f32 %v880, %v841
          %v889 = vadd.f32 %v881, %v842
          %v890 = vadd.f32 %v882, %v843
          %v891 = vadd.f32 %v883, %v844
          %892 = vst [vmem:[#allocation4] sm:$0xff] %v884
          %893 = vst [vmem:[#allocation4 + $0x8] sm:$0xff] %v885
          %894 = vst [vmem:[#allocation4 + $0x10] sm:$0xff] %v886
          %895 = vst [vmem:[#allocation4 + $0x18] sm:$0xff] %v887
          %896 = vst [vmem:[#allocation4 + $0x20] sm:$0xff] %v888
          %897 = vst [vmem:[#allocation4 + $0x28] sm:$0xff] %v889
          %898 = vst [vmem:[#allocation4 + $0x30] sm:$0xff] %v890
          %899 = vst [vmem:[#allocation4 + $0x38] sm:$0xff] %v891
        $region56: #{tpu_custom_call.1} parent=27 // pred_fallthru
          _
        %p900 = scmp.gt.s32.totalorder %s847, 128
        // Predicated region
        $region57: #{tpu_custom_call.1} parent=27 // pred_check
          %p901 = pneg %p900
        $region58: #{tpu_custom_call.1} parent=27 // pred_check_branch
          %903 = sbr.rel (%p901) target = $region60
        $region59: #{tpu_custom_call.1} parent=27 // pred_region
          %v904 = vlaneseq
          %v905 = vshrl.u32 %v904, 7
          %v906 = vadd.s32 %v905, 8
          %v907 = vadd.s32 %v905, 16
          %v908 = vadd.s32 %v905, 24
          %v909 = vadd.s32 %v905, 32
          %v910 = vadd.s32 %v905, 40
          %v911 = vadd.s32 %v905, 48
          %v912 = vadd.s32 %v905, 56
          %v913 = vstv %s846
          %v914 = vadd.s32 %v913, %v905
          %v915 = vadd.s32 %v913, %v906
          %v916 = vadd.s32 %v913, %v907
          %v917 = vadd.s32 %v913, %v908
          %v918 = vadd.s32 %v913, %v909
          %v919 = vadd.s32 %v913, %v910
          %v920 = vadd.s32 %v913, %v911
          %v921 = vadd.s32 %v913, %v912
          %vm922 = vcmp.lt.s32.totalorder %v914, 128
          %vm923 = vcmp.lt.s32.totalorder %v915, 128
          %vm924 = vcmp.lt.s32.totalorder %v916, 128
          %vm925 = vcmp.lt.s32.totalorder %v917, 128
          %vm926 = vcmp.lt.s32.totalorder %v918, 128
          %vm927 = vcmp.lt.s32.totalorder %v919, 128
          %vm928 = vcmp.lt.s32.totalorder %v920, 128
          %vm929 = vcmp.lt.s32.totalorder %v921, 128
          %v930 = vld [vmem:[#allocation3] sm:$0xff]
          %v931 = vld [vmem:[#allocation3 + $0x8] sm:$0xff]
          %v932 = vld [vmem:[#allocation3 + $0x10] sm:$0xff]
          %v933 = vld [vmem:[#allocation3 + $0x18] sm:$0xff]
          %v934 = vld [vmem:[#allocation3 + $0x20] sm:$0xff]
          %v935 = vld [vmem:[#allocation3 + $0x28] sm:$0xff]
          %v936 = vld [vmem:[#allocation3 + $0x30] sm:$0xff]
          %v937 = vld [vmem:[#allocation3 + $0x38] sm:$0xff]
          %v938 = vsel %vm922, %v616, 0.0
          %v939 = vsel %vm923, %v628, 0.0
          %v940 = vsel %vm924, %v640, 0.0
          %v941 = vsel %vm925, %v652, 0.0
          %v942 = vsel %vm926, %v664, 0.0
          %v943 = vsel %vm927, %v676, 0.0
          %v944 = vsel %vm928, %v688, 0.0
          %v945 = vsel %vm929, %v700, 0.0
          %v946 = vadd.f32 %v930, %v938
          %v947 = vadd.f32 %v931, %v939
          %v948 = vadd.f32 %v932, %v940
          %v949 = vadd.f32 %v933, %v941
          %v950 = vadd.f32 %v934, %v942
          %v951 = vadd.f32 %v935, %v943
          %v952 = vadd.f32 %v936, %v944
          %v953 = vadd.f32 %v937, %v945
          %954 = vst [vmem:[#allocation3] sm:$0xff] %v946
          %955 = vst [vmem:[#allocation3 + $0x8] sm:$0xff] %v947
          %956 = vst [vmem:[#allocation3 + $0x10] sm:$0xff] %v948
          %957 = vst [vmem:[#allocation3 + $0x18] sm:$0xff] %v949
          %958 = vst [vmem:[#allocation3 + $0x20] sm:$0xff] %v950
          %959 = vst [vmem:[#allocation3 + $0x28] sm:$0xff] %v951
          %960 = vst [vmem:[#allocation3 + $0x30] sm:$0xff] %v952
          %961 = vst [vmem:[#allocation3 + $0x38] sm:$0xff] %v953
          %v962 = vld [vmem:[#allocation4] sm:$0xff]
          %v963 = vld [vmem:[#allocation4 + $0x8] sm:$0xff]
          %v964 = vld [vmem:[#allocation4 + $0x10] sm:$0xff]
          %v965 = vld [vmem:[#allocation4 + $0x18] sm:$0xff]
          %v966 = vld [vmem:[#allocation4 + $0x20] sm:$0xff]
          %v967 = vld [vmem:[#allocation4 + $0x28] sm:$0xff]
          %v968 = vld [vmem:[#allocation4 + $0x30] sm:$0xff]
          %v969 = vld [vmem:[#allocation4 + $0x38] sm:$0xff]
          %v970 = vsel %vm922, %v837, 0.0
          %v971 = vsel %vm923, %v838, 0.0
          %v972 = vsel %vm924, %v839, 0.0
          %v973 = vsel %vm925, %v840, 0.0
          %v974 = vsel %vm926, %v841, 0.0
          %v975 = vsel %vm927, %v842, 0.0
          %v976 = vsel %vm928, %v843, 0.0
          %v977 = vsel %vm929, %v844, 0.0
          %v978 = vadd.f32 %v962, %v970
          %v979 = vadd.f32 %v963, %v971
          %v980 = vadd.f32 %v964, %v972
          %v981 = vadd.f32 %v965, %v973
          %v982 = vadd.f32 %v966, %v974
          %v983 = vadd.f32 %v967, %v975
          %v984 = vadd.f32 %v968, %v976
          %v985 = vadd.f32 %v969, %v977
          %986 = vst [vmem:[#allocation4] sm:$0xff] %v978
          %987 = vst [vmem:[#allocation4 + $0x8] sm:$0xff] %v979
          %988 = vst [vmem:[#allocation4 + $0x10] sm:$0xff] %v980
          %989 = vst [vmem:[#allocation4 + $0x18] sm:$0xff] %v981
          %990 = vst [vmem:[#allocation4 + $0x20] sm:$0xff] %v982
          %991 = vst [vmem:[#allocation4 + $0x28] sm:$0xff] %v983
          %992 = vst [vmem:[#allocation4 + $0x30] sm:$0xff] %v984
          %993 = vst [vmem:[#allocation4 + $0x38] sm:$0xff] %v985
        $region60: #{tpu_custom_call.1} parent=27 // pred_fallthru
          _
        // Predicated region
        $region61: #{tpu_custom_call.1} parent=27 // pred_check
          %p994 = pneg %p258
        $region62: #{tpu_custom_call.1} parent=27 // pred_check_branch
          %996 = sbr.rel (%p994) target = $region64
        $region63: #{tpu_custom_call.1} parent=27 // pred_region
          %v997 = vld [vmem:[#allocation3] sm:$0xff]
          %v998 = vld [vmem:[#allocation3 + $0x8] sm:$0xff]
          %v999 = vld [vmem:[#allocation3 + $0x10] sm:$0xff]
          %v1000 = vld [vmem:[#allocation3 + $0x18] sm:$0xff]
          %v1001 = vld [vmem:[#allocation3 + $0x20] sm:$0xff]
          %v1002 = vld [vmem:[#allocation3 + $0x28] sm:$0xff]
          %v1003 = vld [vmem:[#allocation3 + $0x30] sm:$0xff]
          %v1004 = vld [vmem:[#allocation3 + $0x38] sm:$0xff]
          %v1005 = vadd.f32 %v997, %v998
          %v1006 = vadd.f32 %v1005, %v999
          %v1007 = vadd.f32 %v1006, %v1000
          %v1008 = vadd.f32 %v1007, %v1001
          %v1009 = vadd.f32 %v1008, %v1002
          %v1010 = vadd.f32 %v1009, %v1003
          %v1011 = vadd.f32 %v1010, %v1004
          %v1012 = vrot.slane %v1011, 4
          %v1013 = vadd.f32 %v1011, %v1012
          %v1014 = vrot.slane %v1013, 2
          %v1015 = vadd.f32 %v1013, %v1014
          %v1016 = vrot.slane %v1015, 1
          %v1017 = vadd.f32 %v1015, %v1016
          %1018 = vst [vmem:[%s226] sm:$0x1] %v1017
          %v1019 = vld [vmem:[#allocation4] sm:$0xff]
          %v1020 = vld [vmem:[#allocation4 + $0x8] sm:$0xff]
          %v1021 = vld [vmem:[#allocation4 + $0x10] sm:$0xff]
          %v1022 = vld [vmem:[#allocation4 + $0x18] sm:$0xff]
          %v1023 = vld [vmem:[#allocation4 + $0x20] sm:$0xff]
          %v1024 = vld [vmem:[#allocation4 + $0x28] sm:$0xff]
          %v1025 = vld [vmem:[#allocation4 + $0x30] sm:$0xff]
          %v1026 = vld [vmem:[#allocation4 + $0x38] sm:$0xff]
          %v1027 = vadd.f32 %v1019, %v1020
          %v1028 = vadd.f32 %v1027, %v1021
          %v1029 = vadd.f32 %v1028, %v1022
          %v1030 = vadd.f32 %v1029, %v1023
          %v1031 = vadd.f32 %v1030, %v1024
          %v1032 = vadd.f32 %v1031, %v1025
          %v1033 = vadd.f32 %v1032, %v1026
          %v1034 = vrot.slane %v1033, 4
          %v1035 = vadd.f32 %v1033, %v1034
          %v1036 = vrot.slane %v1035, 2
          %v1037 = vadd.f32 %v1035, %v1036
          %v1038 = vrot.slane %v1037, 1
          %v1039 = vadd.f32 %v1037, %v1038
          %1040 = vst [vmem:[%s232] sm:$0x1] %v1039
        $region64: #{tpu_custom_call.1} parent=27 // pred_fallthru
          _
        %s1041 = sand.u32 %s106, 1
        %s1042 = scalar_lea.sflag [#allocation6], %s1041
        %s1043 = sand.u32 %s106, 1
        %s1044 = scalar_lea.vmem [#allocation5], %s1043
        %s1045 = sand.u32 %s132, 1
        %s1046 = scalar_lea.sflag [#allocation8], %s1045
        %s1047 = sand.u32 %s132, 1
        %s1048 = scalar_lea.vmem [#allocation7], %s1047
        // Predicated region
        $region65: #{tpu_custom_call.1} parent=27 // pred_check
          %p1049 = pneg %p116
        $region66: #{tpu_custom_call.1} parent=27 // pred_check_branch
          %1051 = sbr.rel (%p1049) target = $region68
        $region67: #{tpu_custom_call.1} parent=27 // pred_region
          %1053 = vsyncadd %s1042, 0
          %s1054 = scalar_lea.hbm %s3, %s26
          %s1056 = sshll.u32 %s1044, 4
          %s1057 = int_to_ptr.vmem [resolvable:$true] %s1056
          %s1058 = sshll.u32 %s1054, 4
          %s1059 = int_to_ptr.hbm [resolvable:$true] %s1058
          %1061 = dma.vmem_to_hbm [thread:$0]  %s1057, 16, %s1059, %s1042
        $region68: #{tpu_custom_call.1} parent=27 // pred_fallthru
          _
        // Predicated region
        $region69: #{tpu_custom_call.1} parent=27 // pred_check
          %p1062 = pneg %p142
        $region70: #{tpu_custom_call.1} parent=27 // pred_check_branch
          %1064 = sbr.rel (%p1062) target = $region72
        $region71: #{tpu_custom_call.1} parent=27 // pred_region
          %1066 = vsyncadd %s1046, 0
          %s1067 = scalar_lea.hbm %s4, %s26
          %s1069 = sshll.u32 %s1048, 4
          %s1070 = int_to_ptr.vmem [resolvable:$true] %s1069
          %s1071 = sshll.u32 %s1067, 4
          %s1072 = int_to_ptr.hbm [resolvable:$true] %s1071
          %1074 = dma.vmem_to_hbm [thread:$0]  %s1070, 16, %s1072, %s1046
        $region72: #{tpu_custom_call.1} parent=27 // pred_fallthru
          _
      $region28: #{tpu_custom_call.1} parent=5 // pred_fallthru
        _
      %p1075 = scmp.le.s32.totalorder 2, %s17
      // Predicated region
      $region73: #{tpu_custom_call.1} parent=5 // pred_check
        %p1076 = pneg %p1075
      $region74: #{tpu_custom_call.1} parent=5 // pred_check_branch
        %1078 = sbr.rel (%p1076) target = $region76
      $region75: #{tpu_custom_call.1} parent=5 // pred_region
        %s1079 = ssub.s32 %s17, 2
        // Predicated region
        $region77: #{tpu_custom_call.1} parent=75 // pred_check
          %p1080 = pneg %p122
        $region78: #{tpu_custom_call.1} parent=75 // pred_check_branch
          %1082 = sbr.rel (%p1080) target = $region80
        $region79: #{tpu_custom_call.1} parent=75 // pred_region
          %s1083 = sand.u32 %s107, 1
          %s1084 = scalar_lea.sflag [#allocation6], %s1083
          %s1085 = sand.u32 %s107, 1
          %s1086 = scalar_lea.vmem [#allocation5], %s1085
          %1088 = dma.done %s1084, 16
        $region80: #{tpu_custom_call.1} parent=75 // pred_fallthru
          _
        // Predicated region
        $region81: #{tpu_custom_call.1} parent=75 // pred_check
          %p1089 = pneg %p148
        $region82: #{tpu_custom_call.1} parent=75 // pred_check_branch
          %1091 = sbr.rel (%p1089) target = $region84
        $region83: #{tpu_custom_call.1} parent=75 // pred_region
          %s1092 = sand.u32 %s133, 1
          %s1093 = scalar_lea.sflag [#allocation8], %s1092
          %s1094 = sand.u32 %s133, 1
          %s1095 = scalar_lea.vmem [#allocation7], %s1094
          %1097 = dma.done %s1093, 16
        $region84: #{tpu_custom_call.1} parent=75 // pred_fallthru
          _
      $region76: #{tpu_custom_call.1} parent=5 // pred_fallthru
        _
    $region6: #{tpu_custom_call.1} parent=1 // loop_footer
      %s21 = sadd.s32 1, %s17
    $region7: #{tpu_custom_call.1} parent=1 // loop_footer_branch
      %16 = sbr.rel target = $region3
    $region8: #{tpu_custom_call.1} parent=1 // loop_exit
      _
    %1098 = vsyncpa [#allocation6], 1
    %s1099 = scalar_lea.sflag [#allocation6], 1
    %1100 = vsyncpa %s1099, 1
    %1101 = vsyncpa [#allocation8], 1
    %s1102 = scalar_lea.sflag [#allocation8], 1
    %1103 = vsyncpa %s1102, 1

</llo_original>
